<compile_context>
chip_gen: v7x
topology: tpu7x:2x2x1
jax: 0.10.0
libtpu: 0.0.40
codegen_flags: <defaults>
</compile_context>

<pallas_src>
import functools

import jax
import jax.numpy as jnp
from jax.experimental import pallas as pl
from jax.experimental.pallas import tpu as pltpu

LANE = 128     # TPU lane width (last dim)
SUBLANE = 8    # f32 sublane count (second-to-last dim)


def _round_up(n, m):
    return ((n + m - 1) // m) * m


def decoder_kernel(x_ref, h_ref, c_ref, w_gates_ref, b_gates_ref, wout_ref,
                   out_ref, hout_ref, cout_ref, *, hp, o_real):
    """Fused LSTMCell + output Linear (no bias) + log-softmax.

    Padded layouts (all f32):
      x, h, c:  (Bp, Hp)          real data in [:B, :H], padding is zero
      w_gates:  (2*Hp, 4*Hp)      rows = [x ; h], gate g cols at [g*Hp : g*Hp+H]
      b_gates:  (1, 4*Hp)         pre-summed b_ih + b_hh, same per-gate layout
      wout:     (Hp, Op)          real data in [:H, :O]
      out:      (Bp, Op), hout/cout: (Bp, Hp)
    """
    x = x_ref[...]
    h = h_ref[...]
    c = c_ref[...]

    # Single fused gate matmul: [x | h] @ [W_ih^T ; W_hh^T]  -> (Bp, 4*Hp)
    xh = jnp.concatenate([x, h], axis=-1)
    gates = jnp.dot(xh, w_gates_ref[...],
                    preferred_element_type=jnp.float32) + b_gates_ref[...]

    # PyTorch gate order (i, f, g, o); each slice is a full 128-lane block.
    i_g = jax.nn.sigmoid(gates[:, 0 * hp:1 * hp])
    f_g = jax.nn.sigmoid(gates[:, 1 * hp:2 * hp])
    g_g = jnp.tanh(gates[:, 2 * hp:3 * hp])
    o_g = jax.nn.sigmoid(gates[:, 3 * hp:4 * hp])

    # Padded lanes: pre-activation 0 -> sigmoid=0.5, tanh=0, and c padding is 0,
    # so c_new / h_new padding stays exactly 0 through the recurrence.
    c_new = f_g * c + i_g * g_g
    h_new = o_g * jnp.tanh(c_new)

    # Output projection on a lane-dense (padded) vocab dimension.
    logits = jnp.dot(h_new, wout_ref[...], preferred_element_type=jnp.float32)

    # Mask padded vocab columns before the softmax reductions.
    col = jax.lax.broadcasted_iota(jnp.int32, logits.shape, 1)
    logits = jnp.where(col < o_real, logits, jnp.float32(-1e30))

    m = jnp.max(logits, axis=-1, keepdims=True)
    z = logits - m
    lse = jnp.log(jnp.sum(jnp.exp(z), axis=-1, keepdims=True))

    out_ref[...] = z - lse
    hout_ref[...] = h_new
    cout_ref[...] = c_new


def init_params(key, hidden_size, out_size):
    """Raw PyTorch-shaped parameters (uniform(-1/sqrt(H), 1/sqrt(H)))."""
    H = hidden_size
    k = 1.0 / jnp.sqrt(jnp.float32(H))
    ks = jax.random.split(key, 5)
    w_ih = jax.random.uniform(ks[0], (4 * H, H), jnp.float32, -k, k)
    w_hh = jax.random.uniform(ks[1], (4 * H, H), jnp.float32, -k, k)
    b_ih = jax.random.uniform(ks[2], (4 * H,), jnp.float32, -k, k)
    b_hh = jax.random.uniform(ks[3], (4 * H,), jnp.float32, -k, k)
    w_out = jax.random.uniform(ks[4], (out_size, H), jnp.float32, -k, k)
    return (w_ih, w_hh, b_ih, b_hh, w_out)


def prepare_params(raw_params):
    """One-time layout prep: transpose, fuse, pre-sum biases, pad.

    Do this ONCE at model-load time, never per forward call.
    """
    w_ih, w_hh, b_ih, b_hh, w_out = raw_params
    H = w_ih.shape[1]
    O = w_out.shape[0]
    Hp = _round_up(H, LANE)
    Op = _round_up(O, LANE)

    w_gates = jnp.zeros((2 * Hp, 4 * Hp), jnp.float32)
    b_gates = jnp.zeros((1, 4 * Hp), jnp.float32)
    b_sum = (b_ih + b_hh).astype(jnp.float32)
    for g in range(4):
        w_gates = w_gates.at[0:H, g * Hp:g * Hp + H].set(
            w_ih[g * H:(g + 1) * H, :].T)
        w_gates = w_gates.at[Hp:Hp + H, g * Hp:g * Hp + H].set(
            w_hh[g * H:(g + 1) * H, :].T)
        b_gates = b_gates.at[0, g * Hp:g * Hp + H].set(b_sum[g * H:(g + 1) * H])

    wout_p = jnp.zeros((Hp, Op), jnp.float32).at[0:H, 0:O].set(w_out.T)

    return dict(w_gates=w_gates, b_gates=b_gates, w_out_t=wout_p,
                H=H, O=O, Hp=Hp, Op=Op)


def decoder_forward(x, prepped, hidden=None):
    """Mirrors Decoder.forward: returns (log_probs, (h_new, c_new))."""
    B, H = x.shape
    Hp, Op, O = prepped["Hp"], prepped["Op"], prepped["O"]
    assert H == prepped["H"]
    Bp = _round_up(B, SUBLANE)

    x_p = jnp.pad(x.astype(jnp.float32), ((0, Bp - B), (0, Hp - H)))
    if hidden is None:
        h_p = jnp.zeros((Bp, Hp), jnp.float32)
        c_p = jnp.zeros((Bp, Hp), jnp.float32)
    else:
        h0, c0 = hidden
        h_p = jnp.pad(h0.astype(jnp.float32), ((0, Bp - B), (0, Hp - H)))
        c_p = jnp.pad(c0.astype(jnp.float32), ((0, Bp - B), (0, Hp - H)))

    vmem = pl.BlockSpec(memory_space=pltpu.MemorySpace.VMEM)
    kernel = functools.partial(decoder_kernel, hp=Hp, o_real=O)

    out_p, h_new_p, c_new_p = pl.pallas_call(
        kernel,
        out_shape=(
            jax.ShapeDtypeStruct((Bp, Op), jnp.float32),
            jax.ShapeDtypeStruct((Bp, Hp), jnp.float32),
            jax.ShapeDtypeStruct((Bp, Hp), jnp.float32),
        ),
        in_specs=[vmem] * 6,
        out_specs=(vmem, vmem, vmem),
    )(x_p, h_p, c_p, prepped["w_gates"], prepped["b_gates"], prepped["w_out_t"])

    out = out_p[:B, :O]
    h_new = h_new_p[:B, :H]
    c_new = c_new_p[:B, :H]
    # PyTorch unpacks LSTMCell's (h, c): out_raw = h, hidden = c.
    return out, (h_new, c_new)


def reference_forward(x, raw_params, hidden=None):
    """Pure-JAX reference of the PyTorch module for correctness checking."""
    w_ih, w_hh, b_ih, b_hh, w_out = raw_params
    B, H = x.shape
    if hidden is None:
        h = jnp.zeros((B, H), jnp.float32)
        c = jnp.zeros((B, H), jnp.float32)
    else:
        h, c = hidden
    gates = x @ w_ih.T + b_ih + h @ w_hh.T + b_hh
    i, f, g, o = jnp.split(gates, 4, axis=-1)
    c_new = jax.nn.sigmoid(f) * c + jax.nn.sigmoid(i) * jnp.tanh(g)
    h_new = jax.nn.sigmoid(o) * jnp.tanh(c_new)
    logits = h_new @ w_out.T
    return jax.nn.log_softmax(logits, axis=-1), (h_new, c_new)


if __name__ == "__main__":
    VOCABULARY_SIZE = 30
    SERVICE_OUTPUT_SIZE = 2          # st.SERVICE_OUTPUT_SIZE stand-in
    HIDDEN_SIZE = 32
    OUT_SIZE = VOCABULARY_SIZE + SERVICE_OUTPUT_SIZE
    BATCH = 2

    key = jax.random.PRNGKey(0)
    k_params, k_x = jax.random.split(key)

    raw_params = init_params(k_params, HIDDEN_SIZE, OUT_SIZE)
    prepped = prepare_params(raw_params)           # one-time prep
    encoder_out = jax.random.normal(k_x, (BATCH, HIDDEN_SIZE), jnp.float32)

    # hidden=None path (zeros init), exactly like the PyTorch module default
    log_probs, (h_new, c_new) = decoder_forward(encoder_out, prepped, hidden=None)
    jax.block_until_ready((log_probs, h_new, c_new))

    # shape checks
    assert log_probs.shape == (BATCH, OUT_SIZE)
    assert h_new.shape == (BATCH, HIDDEN_SIZE)
    assert c_new.shape == (BATCH, HIDDEN_SIZE)

    # log-softmax rows must sum to ~1 in prob space (exact regardless of MXU precision)
    row_sums = jnp.sum(jnp.exp(log_probs), axis=-1)
    assert jnp.allclose(row_sums, jnp.ones_like(row_sums), atol=1e-5)

    # structural correctness vs. pure-JAX reference (loose tol: MXU precision)
    ref_lp, (ref_h, ref_c) = reference_forward(encoder_out, raw_params, hidden=None)
    assert jnp.allclose(log_probs, ref_lp, atol=5e-2, rtol=5e-2)
    assert jnp.allclose(h_new, ref_h, atol=5e-2, rtol=5e-2)
    assert jnp.allclose(c_new, ref_c, atol=5e-2, rtol=5e-2)

    print("KERNEL_OK")
</pallas_src>

<mosaic_0001>
module attributes {stable_mosaic.version = 11 : i64} {
  func.func @decoder_kernel(%arg0: memref<8x128xf32, #tpu.memory_space<vmem>>, %arg1: memref<8x128xf32, #tpu.memory_space<vmem>>, %arg2: memref<8x128xf32, #tpu.memory_space<vmem>>, %arg3: memref<256x512xf32, #tpu.memory_space<vmem>>, %arg4: memref<1x512xf32, #tpu.memory_space<vmem>>, %arg5: memref<128x128xf32, #tpu.memory_space<vmem>>, %arg6: memref<8x128xf32, #tpu.memory_space<vmem>>, %arg7: memref<8x128xf32, #tpu.memory_space<vmem>>, %arg8: memref<8x128xf32, #tpu.memory_space<vmem>>) attributes {dimension_semantics = [], scalar_prefetch = 0 : i64, scratch_operands = 0 : i64, tpu.core_type = #tpu.core_type<tc>} {
    %c0 = arith.constant 0 : index
    %c0_0 = arith.constant 0 : index
    %0 = vector.load %arg0[%c0, %c0_0] : memref<8x128xf32, #tpu.memory_space<vmem>>, vector<8x128xf32>
    %c0_1 = arith.constant 0 : index
    %c0_2 = arith.constant 0 : index
    %1 = vector.load %arg1[%c0_1, %c0_2] : memref<8x128xf32, #tpu.memory_space<vmem>>, vector<8x128xf32>
    %c0_3 = arith.constant 0 : index
    %c0_4 = arith.constant 0 : index
    %2 = vector.load %arg2[%c0_3, %c0_4] : memref<8x128xf32, #tpu.memory_space<vmem>>, vector<8x128xf32>
    %3 = tpu.concatenate %0, %1 in 1 : vector<8x128xf32>, vector<8x128xf32> -> vector<8x256xf32>
    %c0_5 = arith.constant 0 : index
    %c0_6 = arith.constant 0 : index
    %4 = vector.load %arg3[%c0_5, %c0_6] : memref<256x512xf32, #tpu.memory_space<vmem>>, vector<256x512xf32>
    %cst = arith.constant dense<0.000000e+00> : vector<8x512xf32>
    %5 = tpu.matmul %3, %4, %cst {dimension_numbers = #tpu.dot_dimension_numbers<[1], [0], [0], [1], [0, 0, 1, 1], [], []>} : vector<8x256xf32>, vector<256x512xf32>, vector<8x512xf32> -> vector<8x512xf32>
    %c0_7 = arith.constant 0 : index
    %c0_8 = arith.constant 0 : index
    %6 = vector.load %arg4[%c0_7, %c0_8] : memref<1x512xf32, #tpu.memory_space<vmem>>, vector<1x512xf32>
    %7 = vector.broadcast %6 : vector<1x512xf32> to vector<8x512xf32>
    %8 = arith.addf %5, %7 : vector<8x512xf32>
    %9 = vector.extract_strided_slice %8 {offsets = [0, 0], sizes = [8, 128], strides = [1, 1]} : vector<8x512xf32> to vector<8x128xf32>
    %10 = arith.negf %9 : vector<8x128xf32>
    %11 = math.exp %10 : vector<8x128xf32>
    %cst_9 = arith.constant 1.000000e+00 : f32
    %12 = vector.broadcast %cst_9 : f32 to vector<8x128xf32>
    %13 = arith.addf %12, %11 : vector<8x128xf32>
    %14 = arith.divf %12, %13 : vector<8x128xf32>
    %15 = vector.extract_strided_slice %8 {offsets = [0, 128], sizes = [8, 128], strides = [1, 1]} : vector<8x512xf32> to vector<8x128xf32>
    %16 = arith.negf %15 : vector<8x128xf32>
    %17 = math.exp %16 : vector<8x128xf32>
    %cst_10 = arith.constant 1.000000e+00 : f32
    %18 = vector.broadcast %cst_10 : f32 to vector<8x128xf32>
    %19 = arith.addf %18, %17 : vector<8x128xf32>
    %20 = arith.divf %18, %19 : vector<8x128xf32>
    %21 = vector.extract_strided_slice %8 {offsets = [0, 256], sizes = [8, 128], strides = [1, 1]} : vector<8x512xf32> to vector<8x128xf32>
    %22 = math.tanh %21 : vector<8x128xf32>
    %23 = vector.extract_strided_slice %8 {offsets = [0, 384], sizes = [8, 128], strides = [1, 1]} : vector<8x512xf32> to vector<8x128xf32>
    %24 = arith.negf %23 : vector<8x128xf32>
    %25 = math.exp %24 : vector<8x128xf32>
    %cst_11 = arith.constant 1.000000e+00 : f32
    %26 = vector.broadcast %cst_11 : f32 to vector<8x128xf32>
    %27 = arith.addf %26, %25 : vector<8x128xf32>
    %28 = arith.divf %26, %27 : vector<8x128xf32>
    %29 = arith.mulf %20, %2 : vector<8x128xf32>
    %30 = arith.mulf %14, %22 : vector<8x128xf32>
    %31 = arith.addf %29, %30 : vector<8x128xf32>
    %32 = math.tanh %31 : vector<8x128xf32>
    %33 = arith.mulf %28, %32 : vector<8x128xf32>
    %c0_12 = arith.constant 0 : index
    %c0_13 = arith.constant 0 : index
    %34 = vector.load %arg5[%c0_12, %c0_13] : memref<128x128xf32, #tpu.memory_space<vmem>>, vector<128x128xf32>
    %cst_14 = arith.constant dense<0.000000e+00> : vector<8x128xf32>
    %35 = tpu.matmul %33, %34, %cst_14 {dimension_numbers = #tpu.dot_dimension_numbers<[1], [0], [0], [1], [0, 0, 1, 1], [], []>} : vector<8x128xf32>, vector<128x128xf32>, vector<8x128xf32> -> vector<8x128xf32>
    %36 = tpu.iota {dimensions = array<i32: 1>} : vector<8x128xi32>
    %c32_i32 = arith.constant 32 : i32
    %37 = vector.broadcast %c32_i32 : i32 to vector<8x128xi32>
    %38 = arith.cmpi slt, %36, %37 : vector<8x128xi32>
    %cst_15 = arith.constant -1.000000e+30 : f32
    %39 = vector.broadcast %cst_15 : f32 to vector<8x128xf32>
    %40 = arith.select %38, %35, %39 : vector<8x128xi1>, vector<8x128xf32>
    %cst_16 = arith.constant dense<0xFF800000> : vector<8xf32>
    %41 = vector.multi_reduction <maximumf>, %40, %cst_16 [1] : vector<8x128xf32> to vector<8xf32>
    %42 = vector.shape_cast %41 : vector<8xf32> to vector<8x1xf32>
    %43 = vector.broadcast %42 : vector<8x1xf32> to vector<8x128xf32>
    %44 = arith.subf %40, %43 : vector<8x128xf32>
    %45 = math.exp %44 : vector<8x128xf32>
    %cst_17 = arith.constant dense<0.000000e+00> : vector<8xf32>
    %46 = vector.multi_reduction <add>, %45, %cst_17 [1] : vector<8x128xf32> to vector<8xf32>
    %47 = vector.shape_cast %46 : vector<8xf32> to vector<8x1xf32>
    %48 = math.log %47 : vector<8x1xf32>
    %49 = vector.broadcast %48 : vector<8x1xf32> to vector<8x128xf32>
    %50 = arith.subf %44, %49 : vector<8x128xf32>
    %c0_18 = arith.constant 0 : index
    %c0_19 = arith.constant 0 : index
    %51 = vector.load %arg6[%c0_18, %c0_19] : memref<8x128xf32, #tpu.memory_space<vmem>>, vector<8x128xf32>
    tpu.vector_store %arg6[%c0_18, %c0_19], %50 {strides = array<i32>} : memref<8x128xf32, #tpu.memory_space<vmem>>, vector<8x128xf32>,
    %c0_20 = arith.constant 0 : index
    %c0_21 = arith.constant 0 : index
    %52 = vector.load %arg7[%c0_20, %c0_21] : memref<8x128xf32, #tpu.memory_space<vmem>>, vector<8x128xf32>
    tpu.vector_store %arg7[%c0_20, %c0_21], %33 {strides = array<i32>} : memref<8x128xf32, #tpu.memory_space<vmem>>, vector<8x128xf32>,
    %c0_22 = arith.constant 0 : index
    %c0_23 = arith.constant 0 : index
    %53 = vector.load %arg8[%c0_22, %c0_23] : memref<8x128xf32, #tpu.memory_space<vmem>>, vector<8x128xf32>
    tpu.vector_store %arg8[%c0_22, %c0_23], %31 {strides = array<i32>} : memref<8x128xf32, #tpu.memory_space<vmem>>, vector<8x128xf32>,
    return
  }
}

</mosaic_0001>

<llo_original>
// kernel: tpu_custom_call.1
$region0: #{tpu_custom_call.1}
  #allocation0 [shape = 'u32[]', space=smem, size = 0x4, offset = 0x4, fixed_abs, tag = 'smem constant byte address 0x4 - core index']
  #allocation1 [shape = 'u32[144,128]{1,0:T(1,128)}', space=vmem, size = 0x12000, scoped, tag = 'internal scratch']
  %s0 = inlined_call_operand.hbm [shape: f32[8,128], index: 0, kind: input, shape index: {}]
  %s1 = inlined_call_operand.hbm [shape: f32[8,128], index: 1, kind: input, shape index: {}]
  %s2 = inlined_call_operand.hbm [shape: f32[8,128], index: 2, kind: input, shape index: {}]
  %s3 = inlined_call_operand.hbm [shape: f32[256,512], index: 3, kind: input, shape index: {}]
  %s4 = inlined_call_operand.vmem [shape: f32[1,512], index: 4, kind: input, shape index: {}]
  %s5 = inlined_call_operand.hbm [shape: f32[128,128], index: 5, kind: input, shape index: {}]
  %s6 = inlined_call_operand.hbm [shape: f32[8,128], index: 6, kind: output, shape index: {0}]
  %s7 = inlined_call_operand.hbm [shape: f32[8,128], index: 7, kind: output, shape index: {1}]
  %s8 = inlined_call_operand.hbm [shape: f32[8,128], index: 8, kind: output, shape index: {2}]
  %9 = xla_tuple %s6, %s7, %s8
  %s10 = sld [smem:[#allocation0]]
  $region70: #{tpu_custom_call.1} parent=0
    _
  %s12 = ssub.s32 1, %s10
  %s13 = scalar_select 0, %s12, %s10
  $region1: #{tpu_custom_call.1} parent=0
    #allocation2 [shape = 'u8[4096]{0}', space=vmem, size = 0x1000, scoped, tag = 'input window, operand 0, single buffered']
    #allocation3 [shape = 's32[1]{0}', space=sflag, size = 0x4, scoped, tag = 'scoped memory for tpu_custom_call.1']
    #allocation4 [shape = 's32[1]{0}', space=sflag, size = 0x4, scoped, tag = 'scoped memory for tpu_custom_call.1']
    #allocation5 [shape = 'u8[4096]{0}', space=vmem, size = 0x1000, scoped, tag = 'input window, operand 1, single buffered']
    #allocation6 [shape = 's32[1]{0}', space=sflag, size = 0x4, scoped, tag = 'scoped memory for tpu_custom_call.1']
    #allocation7 [shape = 'u8[4096]{0}', space=vmem, size = 0x1000, scoped, tag = 'input window, operand 2, single buffered']
    #allocation8 [shape = 'u8[524288]{0}', space=vmem, size = 0x80000, scoped, tag = 'input window, operand 3, single buffered']
    #allocation9 [shape = 's32[1]{0}', space=sflag, size = 0x4, scoped, tag = 'scoped memory for tpu_custom_call.1']
    #allocation10 [shape = 'u8[65536]{0}', space=vmem, size = 0x10000, scoped, tag = 'input window, operand 5, single buffered']
    #allocation11 [shape = 'u8[4096]{0}', space=vmem, size = 0x1000, scoped, tag = 'output window, operand 0, single buffered']
    #allocation12 [shape = 'u8[4096]{0}', space=vmem, size = 0x1000, scoped, tag = 'output window, operand 1, single buffered']
    #allocation13 [shape = 's32[1]{0}', space=sflag, size = 0x4, scoped, tag = 'scoped memory for tpu_custom_call.1']
    #allocation14 [shape = 'u8[4096]{0}', space=vmem, size = 0x1000, scoped, tag = 'output window, operand 2, single buffered']
    %14 = vsyncpa [#allocation3], 0
    %15 = vsyncpa [#allocation6], 0
    %16 = vsyncpa [#allocation9], 0
    %17 = vsyncpa [#allocation4], 0
    %18 = vsyncpa [#allocation13], 0
    // Predicated region
    $region2: #{tpu_custom_call.1} parent=1 // pred_check
      _
    $region3: #{tpu_custom_call.1} parent=1 // pred_check_branch
      %20 = sbr.rel (0) target = $region5
    $region4: #{tpu_custom_call.1} parent=1 // pred_region
      %s22 = ssub.s32 128, 128
      %23 = vsyncadd [#allocation3], %s22
      %s25 = sshll.u32 [#allocation2], 4
      %s26 = int_to_ptr.vmem [resolvable:$true] %s25
      %28 = dma.hbm_to_vmem [thread:$0]  %s0, 128, %s26, [#allocation3]
    $region5: #{tpu_custom_call.1} parent=1 // pred_fallthru
      _
    // Predicated region
    $region6: #{tpu_custom_call.1} parent=1 // pred_check
      _
    $region7: #{tpu_custom_call.1} parent=1 // pred_check_branch
      %30 = sbr.rel (0) target = $region9
    $region8: #{tpu_custom_call.1} parent=1 // pred_region
      %s32 = ssub.s32 128, 128
      %33 = vsyncadd [#allocation6], %s32
      %s35 = sshll.u32 [#allocation5], 4
      %s36 = int_to_ptr.vmem [resolvable:$true] %s35
      %38 = dma.hbm_to_vmem [thread:$0]  %s1, 128, %s36, [#allocation6]
    $region9: #{tpu_custom_call.1} parent=1 // pred_fallthru
      _
    // Predicated region
    $region10: #{tpu_custom_call.1} parent=1 // pred_check
      _
    $region11: #{tpu_custom_call.1} parent=1 // pred_check_branch
      %40 = sbr.rel (0) target = $region13
    $region12: #{tpu_custom_call.1} parent=1 // pred_region
      %s42 = ssub.s32 128, 128
      %43 = vsyncadd [#allocation6], %s42
      %s45 = sshll.u32 [#allocation7], 4
      %s46 = int_to_ptr.vmem [resolvable:$true] %s45
      %48 = dma.hbm_to_vmem [thread:$0]  %s2, 128, %s46, [#allocation6]
    $region13: #{tpu_custom_call.1} parent=1 // pred_fallthru
      _
    // Predicated region
    $region14: #{tpu_custom_call.1} parent=1 // pred_check
      _
    $region15: #{tpu_custom_call.1} parent=1 // pred_check_branch
      %50 = sbr.rel (0) target = $region17
    $region16: #{tpu_custom_call.1} parent=1 // pred_region
      %s52 = ssub.s32 16384, 16384
      %53 = vsyncadd [#allocation9], %s52
      %s54 = sshll.u32 [#allocation8], 4
      %s55 = int_to_ptr.vmem [resolvable:$true] %s54
      %60 = dma.hbm_to_vmem [thread:$0]  %s3, 16384, %s55, [#allocation9], 512, 512, 32
    $region17: #{tpu_custom_call.1} parent=1 // pred_fallthru
      _
    // Predicated region
    $region18: #{tpu_custom_call.1} parent=1 // pred_check
      _
    $region19: #{tpu_custom_call.1} parent=1 // pred_check_branch
      %62 = sbr.rel (0) target = $region21
    $region20: #{tpu_custom_call.1} parent=1 // pred_region
      _
    $region21: #{tpu_custom_call.1} parent=1 // pred_fallthru
      _
    // Predicated region
    $region22: #{tpu_custom_call.1} parent=1 // pred_check
      _
    $region23: #{tpu_custom_call.1} parent=1 // pred_check_branch
      %64 = sbr.rel (0) target = $region25
    $region24: #{tpu_custom_call.1} parent=1 // pred_region
      %s66 = ssub.s32 2048, 2048
      %67 = vsyncadd [#allocation9], %s66
      %s68 = sshll.u32 [#allocation10], 4
      %s69 = int_to_ptr.vmem [resolvable:$true] %s68
      %74 = dma.hbm_to_vmem [thread:$0]  %s5, 2048, %s69, [#allocation9], 128, 128, 8
    $region25: #{tpu_custom_call.1} parent=1 // pred_fallthru
      _
    // Predicated region
    $region26: #{tpu_custom_call.1} parent=1 // pred_check
      _
    $region27: #{tpu_custom_call.1} parent=1 // pred_check_branch
      %76 = sbr.rel (0) target = $region29
    $region28: #{tpu_custom_call.1} parent=1 // pred_region
      %77 = dma.done [#allocation3], 128
    $region29: #{tpu_custom_call.1} parent=1 // pred_fallthru
      _
    // Predicated region
    $region30: #{tpu_custom_call.1} parent=1 // pred_check
      _
    $region31: #{tpu_custom_call.1} parent=1 // pred_check_branch
      %79 = sbr.rel (0) target = $region33
    $region32: #{tpu_custom_call.1} parent=1 // pred_region
      %80 = dma.done [#allocation6], 128
    $region33: #{tpu_custom_call.1} parent=1 // pred_fallthru
      _
    // Predicated region
    $region34: #{tpu_custom_call.1} parent=1 // pred_check
      _
    $region35: #{tpu_custom_call.1} parent=1 // pred_check_branch
      %82 = sbr.rel (0) target = $region37
    $region36: #{tpu_custom_call.1} parent=1 // pred_region
      %83 = dma.done [#allocation6], 128
    $region37: #{tpu_custom_call.1} parent=1 // pred_fallthru
      _
    // Predicated region
    $region38: #{tpu_custom_call.1} parent=1 // pred_check
      _
    $region39: #{tpu_custom_call.1} parent=1 // pred_check_branch
      %85 = sbr.rel (0) target = $region41
    $region40: #{tpu_custom_call.1} parent=1 // pred_region
      %86 = dma.done [#allocation9], 16384
    $region41: #{tpu_custom_call.1} parent=1 // pred_fallthru
      _
    // Predicated region
    $region42: #{tpu_custom_call.1} parent=1 // pred_check
      _
    $region43: #{tpu_custom_call.1} parent=1 // pred_check_branch
      %88 = sbr.rel (0) target = $region45
    $region44: #{tpu_custom_call.1} parent=1 // pred_region
      %89 = dma.done [#allocation9], 2048
    $region45: #{tpu_custom_call.1} parent=1 // pred_fallthru
      _
    %v90 = vld [vmem:[#allocation2] sm:$0xff]
    %v91 = vld [vmem:[#allocation5] sm:$0xff]
    %v92 = vld [vmem:[#allocation7] sm:$0xff]
    %v93 = vld [vmem:[#allocation8] sm:$0xff]
    %v94 = vld [vmem:[#allocation8 + $0x8] sm:$0xff]
    %v95 = vld [vmem:[#allocation8 + $0x10] sm:$0xff]
    %v96 = vld [vmem:[#allocation8 + $0x18] sm:$0xff]
    %v97 = vld [vmem:[#allocation8 + $0x20] sm:$0xff]
    %v98 = vld [vmem:[#allocation8 + $0x28] sm:$0xff]
    %v99 = vld [vmem:[#allocation8 + $0x30] sm:$0xff]
    %v100 = vld [vmem:[#allocation8 + $0x38] sm:$0xff]
    %v101 = vld [vmem:[#allocation8 + $0x40] sm:$0xff]
    %v102 = vld [vmem:[#allocation8 + $0x48] sm:$0xff]
    %v103 = vld [vmem:[#allocation8 + $0x50] sm:$0xff]
    %v104 = vld [vmem:[#allocation8 + $0x58] sm:$0xff]
    %v105 = vld [vmem:[#allocation8 + $0x60] sm:$0xff]
    %v106 = vld [vmem:[#allocation8 + $0x68] sm:$0xff]
    %v107 = vld [vmem:[#allocation8 + $0x70] sm:$0xff]
    %v108 = vld [vmem:[#allocation8 + $0x78] sm:$0xff]
    %v109 = vld [vmem:[#allocation8 + $0x80] sm:$0xff]
    %v110 = vld [vmem:[#allocation8 + $0x88] sm:$0xff]
    %v111 = vld [vmem:[#allocation8 + $0x90] sm:$0xff]
    %v112 = vld [vmem:[#allocation8 + $0x98] sm:$0xff]
    %v113 = vld [vmem:[#allocation8 + $0xa0] sm:$0xff]
    %v114 = vld [vmem:[#allocation8 + $0xa8] sm:$0xff]
    %v115 = vld [vmem:[#allocation8 + $0xb0] sm:$0xff]
    %v116 = vld [vmem:[#allocation8 + $0xb8] sm:$0xff]
    %v117 = vld [vmem:[#allocation8 + $0xc0] sm:$0xff]
    %v118 = vld [vmem:[#allocation8 + $0xc8] sm:$0xff]
    %v119 = vld [vmem:[#allocation8 + $0xd0] sm:$0xff]
    %v120 = vld [vmem:[#allocation8 + $0xd8] sm:$0xff]
    %v121 = vld [vmem:[#allocation8 + $0xe0] sm:$0xff]
    %v122 = vld [vmem:[#allocation8 + $0xe8] sm:$0xff]
    %v123 = vld [vmem:[#allocation8 + $0xf0] sm:$0xff]
    %v124 = vld [vmem:[#allocation8 + $0xf8] sm:$0xff]
    %v125 = vld [vmem:[#allocation8 + $0x100] sm:$0xff]
    %v126 = vld [vmem:[#allocation8 + $0x108] sm:$0xff]
    %v127 = vld [vmem:[#allocation8 + $0x110] sm:$0xff]
    %v128 = vld [vmem:[#allocation8 + $0x118] sm:$0xff]
    %v129 = vld [vmem:[#allocation8 + $0x120] sm:$0xff]
    %v130 = vld [vmem:[#allocation8 + $0x128] sm:$0xff]
    %v131 = vld [vmem:[#allocation8 + $0x130] sm:$0xff]
    %v132 = vld [vmem:[#allocation8 + $0x138] sm:$0xff]
    %v133 = vld [vmem:[#allocation8 + $0x140] sm:$0xff]
    %v134 = vld [vmem:[#allocation8 + $0x148] sm:$0xff]
    %v135 = vld [vmem:[#allocation8 + $0x150] sm:$0xff]
    %v136 = vld [vmem:[#allocation8 + $0x158] sm:$0xff]
    %v137 = vld [vmem:[#allocation8 + $0x160] sm:$0xff]
    %v138 = vld [vmem:[#allocation8 + $0x168] sm:$0xff]
    %v139 = vld [vmem:[#allocation8 + $0x170] sm:$0xff]
    %v140 = vld [vmem:[#allocation8 + $0x178] sm:$0xff]
    %v141 = vld [vmem:[#allocation8 + $0x180] sm:$0xff]
    %v142 = vld [vmem:[#allocation8 + $0x188] sm:$0xff]
    %v143 = vld [vmem:[#allocation8 + $0x190] sm:$0xff]
    %v144 = vld [vmem:[#allocation8 + $0x198] sm:$0xff]
    %v145 = vld [vmem:[#allocation8 + $0x1a0] sm:$0xff]
    %v146 = vld [vmem:[#allocation8 + $0x1a8] sm:$0xff]
    %v147 = vld [vmem:[#allocation8 + $0x1b0] sm:$0xff]
    %v148 = vld [vmem:[#allocation8 + $0x1b8] sm:$0xff]
    %v149 = vld [vmem:[#allocation8 + $0x1c0] sm:$0xff]
    %v150 = vld [vmem:[#allocation8 + $0x1c8] sm:$0xff]
    %v151 = vld [vmem:[#allocation8 + $0x1d0] sm:$0xff]
    %v152 = vld [vmem:[#allocation8 + $0x1d8] sm:$0xff]
    %v153 = vld [vmem:[#allocation8 + $0x1e0] sm:$0xff]
    %v154 = vld [vmem:[#allocation8 + $0x1e8] sm:$0xff]
    %v155 = vld [vmem:[#allocation8 + $0x1f0] sm:$0xff]
    %v156 = vld [vmem:[#allocation8 + $0x1f8] sm:$0xff]
    %v157 = vld [vmem:[#allocation8 + $0x200] sm:$0xff]
    %v158 = vld [vmem:[#allocation8 + $0x208] sm:$0xff]
    %v159 = vld [vmem:[#allocation8 + $0x210] sm:$0xff]
    %v160 = vld [vmem:[#allocation8 + $0x218] sm:$0xff]
    %v161 = vld [vmem:[#allocation8 + $0x220] sm:$0xff]
    %v162 = vld [vmem:[#allocation8 + $0x228] sm:$0xff]
    %v163 = vld [vmem:[#allocation8 + $0x230] sm:$0xff]
    %v164 = vld [vmem:[#allocation8 + $0x238] sm:$0xff]
    %v165 = vld [vmem:[#allocation8 + $0x240] sm:$0xff]
    %v166 = vld [vmem:[#allocation8 + $0x248] sm:$0xff]
    %v167 = vld [vmem:[#allocation8 + $0x250] sm:$0xff]
    %v168 = vld [vmem:[#allocation8 + $0x258] sm:$0xff]
    %v169 = vld [vmem:[#allocation8 + $0x260] sm:$0xff]
    %v170 = vld [vmem:[#allocation8 + $0x268] sm:$0xff]
    %v171 = vld [vmem:[#allocation8 + $0x270] sm:$0xff]
    %v172 = vld [vmem:[#allocation8 + $0x278] sm:$0xff]
    %v173 = vld [vmem:[#allocation8 + $0x280] sm:$0xff]
    %v174 = vld [vmem:[#allocation8 + $0x288] sm:$0xff]
    %v175 = vld [vmem:[#allocation8 + $0x290] sm:$0xff]
    %v176 = vld [vmem:[#allocation8 + $0x298] sm:$0xff]
    %v177 = vld [vmem:[#allocation8 + $0x2a0] sm:$0xff]
    %v178 = vld [vmem:[#allocation8 + $0x2a8] sm:$0xff]
    %v179 = vld [vmem:[#allocation8 + $0x2b0] sm:$0xff]
    %v180 = vld [vmem:[#allocation8 + $0x2b8] sm:$0xff]
    %v181 = vld [vmem:[#allocation8 + $0x2c0] sm:$0xff]
    %v182 = vld [vmem:[#allocation8 + $0x2c8] sm:$0xff]
    %v183 = vld [vmem:[#allocation8 + $0x2d0] sm:$0xff]
    %v184 = vld [vmem:[#allocation8 + $0x2d8] sm:$0xff]
    %v185 = vld [vmem:[#allocation8 + $0x2e0] sm:$0xff]
    %v186 = vld [vmem:[#allocation8 + $0x2e8] sm:$0xff]
    %v187 = vld [vmem:[#allocation8 + $0x2f0] sm:$0xff]
    %v188 = vld [vmem:[#allocation8 + $0x2f8] sm:$0xff]
    %v189 = vld [vmem:[#allocation8 + $0x300] sm:$0xff]
    %v190 = vld [vmem:[#allocation8 + $0x308] sm:$0xff]
    %v191 = vld [vmem:[#allocation8 + $0x310] sm:$0xff]
    %v192 = vld [vmem:[#allocation8 + $0x318] sm:$0xff]
    %v193 = vld [vmem:[#allocation8 + $0x320] sm:$0xff]
    %v194 = vld [vmem:[#allocation8 + $0x328] sm:$0xff]
    %v195 = vld [vmem:[#allocation8 + $0x330] sm:$0xff]
    %v196 = vld [vmem:[#allocation8 + $0x338] sm:$0xff]
    %v197 = vld [vmem:[#allocation8 + $0x340] sm:$0xff]
    %v198 = vld [vmem:[#allocation8 + $0x348] sm:$0xff]
    %v199 = vld [vmem:[#allocation8 + $0x350] sm:$0xff]
    %v200 = vld [vmem:[#allocation8 + $0x358] sm:$0xff]
    %v201 = vld [vmem:[#allocation8 + $0x360] sm:$0xff]
    %v202 = vld [vmem:[#allocation8 + $0x368] sm:$0xff]
    %v203 = vld [vmem:[#allocation8 + $0x370] sm:$0xff]
    %v204 = vld [vmem:[#allocation8 + $0x378] sm:$0xff]
    %v205 = vld [vmem:[#allocation8 + $0x380] sm:$0xff]
    %v206 = vld [vmem:[#allocation8 + $0x388] sm:$0xff]
    %v207 = vld [vmem:[#allocation8 + $0x390] sm:$0xff]
    %v208 = vld [vmem:[#allocation8 + $0x398] sm:$0xff]
    %v209 = vld [vmem:[#allocation8 + $0x3a0] sm:$0xff]
    %v210 = vld [vmem:[#allocation8 + $0x3a8] sm:$0xff]
    %v211 = vld [vmem:[#allocation8 + $0x3b0] sm:$0xff]
    %v212 = vld [vmem:[#allocation8 + $0x3b8] sm:$0xff]
    %v213 = vld [vmem:[#allocation8 + $0x3c0] sm:$0xff]
    %v214 = vld [vmem:[#allocation8 + $0x3c8] sm:$0xff]
    %v215 = vld [vmem:[#allocation8 + $0x3d0] sm:$0xff]
    %v216 = vld [vmem:[#allocation8 + $0x3d8] sm:$0xff]
    %v217 = vld [vmem:[#allocation8 + $0x3e0] sm:$0xff]
    %v218 = vld [vmem:[#allocation8 + $0x3e8] sm:$0xff]
    %v219 = vld [vmem:[#allocation8 + $0x3f0] sm:$0xff]
    %v220 = vld [vmem:[#allocation8 + $0x3f8] sm:$0xff]
    %v221 = vld [vmem:[%s4] sm:$0xf]
    %v223 = vlaneseq
    %v224 = vshrl.u32 %v223, 7
    %v225 = vsub.s32 0, %v224
    %v226 = vrot.slane %v221, %v225
    %v227 = vlaneseq
    %v228 = vshrl.u32 %v227, 7
    %v229 = vsub.s32 1, %v228
    %v230 = vrot.slane %v221, %v229
    %v231 = vlaneseq
    %v232 = vshrl.u32 %v231, 7
    %v233 = vsub.s32 2, %v232
    %v234 = vrot.slane %v221, %v233
    %v235 = vlaneseq
    %v236 = vshrl.u32 %v235, 7
    %v237 = vsub.s32 3, %v236
    %v238 = vrot.slane %v221, %v237
    %243 = vmatprep.subr.mxu0 %v94
    %244 = vmatpush1.msra.mxu0 %v93
    %245 = vmatprep.subr.mxu0 %v98
    %246 = vmatpush1.msra.mxu0 %v97
    %247 = vmatprep.subr.mxu0 %v102
    %248 = vmatpush1.msra.mxu0 %v101
    %249 = vmatprep.subr.mxu0 %v106
    %250 = vmatpush1.msra.mxu0 %v105
    %251 = vmatprep.subr.mxu0 %v110
    %252 = vmatpush1.msra.mxu0 %v109
    %253 = vmatprep.subr.mxu0 %v114
    %254 = vmatpush1.msra.mxu0 %v113
    %255 = vmatprep.subr.mxu0 %v118
    %256 = vmatpush1.msra.mxu0 %v117
    %257 = vmatprep.subr.mxu0 %v122
    %258 = vmatpush1.msra.mxu0 %v121
    %259 = vmatprep.subr.mxu0 %v126
    %260 = vmatpush1.msra.mxu0 %v125
    %261 = vmatprep.subr.mxu0 %v130
    %262 = vmatpush1.msra.mxu0 %v129
    %263 = vmatprep.subr.mxu0 %v134
    %264 = vmatpush1.msra.mxu0 %v133
    %265 = vmatprep.subr.mxu0 %v138
    %266 = vmatpush1.msra.mxu0 %v137
    %267 = vmatprep.subr.mxu0 %v142
    %268 = vmatpush1.msra.mxu0 %v141
    %269 = vmatprep.subr.mxu0 %v146
    %270 = vmatpush1.msra.mxu0 %v145
    %271 = vmatprep.subr.mxu0 %v150
    %272 = vmatpush1.msra.mxu0 %v149
    %273 = vmatprep.subr.mxu0 %v154
    %274 = vmatpush1.msra.mxu0 %v153
    %275 = vmatprep.subr.mxu0 %v158
    %276 = vmatpush1.msra.mxu0 %v157
    %277 = vmatprep.subr.mxu0 %v162
    %278 = vmatpush1.msra.mxu0 %v161
    %279 = vmatprep.subr.mxu0 %v166
    %280 = vmatpush1.msra.mxu0 %v165
    %281 = vmatprep.subr.mxu0 %v170
    %282 = vmatpush1.msra.mxu0 %v169
    %283 = vmatprep.subr.mxu0 %v174
    %284 = vmatpush1.msra.mxu0 %v173
    %285 = vmatprep.subr.mxu0 %v178
    %286 = vmatpush1.msra.mxu0 %v177
    %287 = vmatprep.subr.mxu0 %v182
    %288 = vmatpush1.msra.mxu0 %v181
    %289 = vmatprep.subr.mxu0 %v186
    %290 = vmatpush1.msra.mxu0 %v185
    %291 = vmatprep.subr.mxu0 %v190
    %292 = vmatpush1.msra.mxu0 %v189
    %293 = vmatprep.subr.mxu0 %v194
    %294 = vmatpush1.msra.mxu0 %v193
    %295 = vmatprep.subr.mxu0 %v198
    %296 = vmatpush1.msra.mxu0 %v197
    %297 = vmatprep.subr.mxu0 %v202
    %298 = vmatpush1.msra.mxu0 %v201
    %299 = vmatprep.subr.mxu0 %v206
    %300 = vmatpush1.msra.mxu0 %v205
    %301 = vmatprep.subr.mxu0 %v210
    %302 = vmatpush1.msra.mxu0 %v209
    %303 = vmatprep.subr.mxu0 %v214
    %304 = vmatpush1.msra.mxu0 %v213
    %305 = vmatprep.subr.mxu0 %v218
    %306 = vmatpush1.msra.mxu0 %v217
    %307 = vmatprep.mubr.f32.mxu0 %v91
    %308 = vmatmul.mubr.f32.gmra.mrb[0].mxu0 %v90
    %v309 = vpop.f32.mrb[0].mxu0
    %v310 = vadd.f32 %v226, %v309
    %v311 = vpop.f32.mrb[0].mxu0
    %v312 = vadd.f32 %v230, %v311
    %313 = vdwg.mxu0
    %314 = vmatprep.subr.mxu0 %v96
    %315 = vmatpush1.msra.mxu0 %v95
    %316 = vmatprep.subr.mxu0 %v100
    %317 = vmatpush1.msra.mxu0 %v99
    %318 = vmatprep.subr.mxu0 %v104
    %319 = vmatpush1.msra.mxu0 %v103
    %320 = vmatprep.subr.mxu0 %v108
    %321 = vmatpush1.msra.mxu0 %v107
    %322 = vmatprep.subr.mxu0 %v112
    %323 = vmatpush1.msra.mxu0 %v111
    %324 = vmatprep.subr.mxu0 %v116
    %325 = vmatpush1.msra.mxu0 %v115
    %326 = vmatprep.subr.mxu0 %v120
    %327 = vmatpush1.msra.mxu0 %v119
    %328 = vmatprep.subr.mxu0 %v124
    %329 = vmatpush1.msra.mxu0 %v123
    %330 = vmatprep.subr.mxu0 %v128
    %331 = vmatpush1.msra.mxu0 %v127
    %332 = vmatprep.subr.mxu0 %v132
    %333 = vmatpush1.msra.mxu0 %v131
    %334 = vmatprep.subr.mxu0 %v136
    %335 = vmatpush1.msra.mxu0 %v135
    %336 = vmatprep.subr.mxu0 %v140
    %337 = vmatpush1.msra.mxu0 %v139
    %338 = vmatprep.subr.mxu0 %v144
    %339 = vmatpush1.msra.mxu0 %v143
    %340 = vmatprep.subr.mxu0 %v148
    %341 = vmatpush1.msra.mxu0 %v147
    %342 = vmatprep.subr.mxu0 %v152
    %343 = vmatpush1.msra.mxu0 %v151
    %344 = vmatprep.subr.mxu0 %v156
    %345 = vmatpush1.msra.mxu0 %v155
    %346 = vmatprep.subr.mxu0 %v160
    %347 = vmatpush1.msra.mxu0 %v159
    %348 = vmatprep.subr.mxu0 %v164
    %349 = vmatpush1.msra.mxu0 %v163
    %350 = vmatprep.subr.mxu0 %v168
    %351 = vmatpush1.msra.mxu0 %v167
    %352 = vmatprep.subr.mxu0 %v172
    %353 = vmatpush1.msra.mxu0 %v171
    %354 = vmatprep.subr.mxu0 %v176
    %355 = vmatpush1.msra.mxu0 %v175
    %356 = vmatprep.subr.mxu0 %v180
    %357 = vmatpush1.msra.mxu0 %v179
    %358 = vmatprep.subr.mxu0 %v184
    %359 = vmatpush1.msra.mxu0 %v183
    %360 = vmatprep.subr.mxu0 %v188
    %361 = vmatpush1.msra.mxu0 %v187
    %362 = vmatprep.subr.mxu0 %v192
    %363 = vmatpush1.msra.mxu0 %v191
    %364 = vmatprep.subr.mxu0 %v196
    %365 = vmatpush1.msra.mxu0 %v195
    %366 = vmatprep.subr.mxu0 %v200
    %367 = vmatpush1.msra.mxu0 %v199
    %368 = vmatprep.subr.mxu0 %v204
    %369 = vmatpush1.msra.mxu0 %v203
    %370 = vmatprep.subr.mxu0 %v208
    %371 = vmatpush1.msra.mxu0 %v207
    %372 = vmatprep.subr.mxu0 %v212
    %373 = vmatpush1.msra.mxu0 %v211
    %374 = vmatprep.subr.mxu0 %v216
    %375 = vmatpush1.msra.mxu0 %v215
    %376 = vmatprep.subr.mxu0 %v220
    %377 = vmatpush1.msra.mxu0 %v219
    %378 = vmatprep.mubr.f32.mxu0 %v91
    %379 = vmatmul.mubr.f32.gmra.mrb[0].mxu0 %v90
    %v380 = vpop.f32.mrb[0].mxu0
    %v381 = vadd.f32 %v234, %v380
    %v382 = vpop.f32.mrb[0].mxu0
    %v383 = vadd.f32 %v238, %v382
    %384 = vdwg.mxu0
    %v385 = vxor.u32 %v310, 2147483648
    %v386 = vmul.f32 %v385, 1.442695
    %v387 = vpow.pop %v386
    %v388 = vadd.f32 %v387, 1.0
    %v389 = vrcp.pop %v388
    %v390 = vmul.f32 1.0, %v389
    %v391 = vxor.u32 %v312, 2147483648
    %v392 = vmul.f32 %v391, 1.442695
    %v393 = vpow.pop %v392
    %v394 = vadd.f32 %v393, 1.0
    %v395 = vrcp.pop %v394
    %v396 = vmul.f32 1.0, %v395
    %v397 = vtanh.pop %v381
    %v398 = vxor.u32 %v383, 2147483648
    %v399 = vmul.f32 %v398, 1.442695
    %v400 = vpow.pop %v399
    %v401 = vadd.f32 %v400, 1.0
    %v402 = vrcp.pop %v401
    %v403 = vmul.f32 1.0, %v402
    %v404 = vmul.f32 %v396, %v92
    %v405 = vmul.f32 %v390, %v397
    %v406 = vadd.f32 %v404, %v405
    %v407 = vtanh.pop %v406
    %v408 = vmul.f32 %v403, %v407
    %v409 = vld [vmem:[#allocation10] sm:$0xff]
    %v410 = vld [vmem:[#allocation10 + $0x8] sm:$0xff]
    %v411 = vld [vmem:[#allocation10 + $0x10] sm:$0xff]
    %v412 = vld [vmem:[#allocation10 + $0x18] sm:$0xff]
    %v413 = vld [vmem:[#allocation10 + $0x20] sm:$0xff]
    %v414 = vld [vmem:[#allocation10 + $0x28] sm:$0xff]
    %v415 = vld [vmem:[#allocation10 + $0x30] sm:$0xff]
    %v416 = vld [vmem:[#allocation10 + $0x38] sm:$0xff]
    %v417 = vld [vmem:[#allocation10 + $0x40] sm:$0xff]
    %v418 = vld [vmem:[#allocation10 + $0x48] sm:$0xff]
    %v419 = vld [vmem:[#allocation10 + $0x50] sm:$0xff]
    %v420 = vld [vmem:[#allocation10 + $0x58] sm:$0xff]
    %v421 = vld [vmem:[#allocation10 + $0x60] sm:$0xff]
    %v422 = vld [vmem:[#allocation10 + $0x68] sm:$0xff]
    %v423 = vld [vmem:[#allocation10 + $0x70] sm:$0xff]
    %v424 = vld [vmem:[#allocation10 + $0x78] sm:$0xff]
    %425 = vmatprep.subr.mxu0 0.0
    %426 = vmatpush1.msra.mxu0 %v409
    %427 = vmatprep.subr.mxu0 0.0
    %428 = vmatpush1.msra.mxu0 %v410
    %429 = vmatprep.subr.mxu0 0.0
    %430 = vmatpush1.msra.mxu0 %v411
    %431 = vmatprep.subr.mxu0 0.0
    %432 = vmatpush1.msra.mxu0 %v412
    %433 = vmatprep.subr.mxu0 0.0
    %434 = vmatpush1.msra.mxu0 %v413
    %435 = vmatprep.subr.mxu0 0.0
    %436 = vmatpush1.msra.mxu0 %v414
    %437 = vmatprep.subr.mxu0 0.0
    %438 = vmatpush1.msra.mxu0 %v415
    %439 = vmatprep.subr.mxu0 0.0
    %440 = vmatpush1.msra.mxu0 %v416
    %441 = vmatprep.subr.mxu0 0.0
    %442 = vmatpush1.msra.mxu0 %v417
    %443 = vmatprep.subr.mxu0 0.0
    %444 = vmatpush1.msra.mxu0 %v418
    %445 = vmatprep.subr.mxu0 0.0
    %446 = vmatpush1.msra.mxu0 %v419
    %447 = vmatprep.subr.mxu0 0.0
    %448 = vmatpush1.msra.mxu0 %v420
    %449 = vmatprep.subr.mxu0 0.0
    %450 = vmatpush1.msra.mxu0 %v421
    %451 = vmatprep.subr.mxu0 0.0
    %452 = vmatpush1.msra.mxu0 %v422
    %453 = vmatprep.subr.mxu0 0.0
    %454 = vmatpush1.msra.mxu0 %v423
    %455 = vmatprep.subr.mxu0 0.0
    %456 = vmatpush1.msra.mxu0 %v424
    %457 = vmatprep.subr.mxu0 0.0
    %458 = vmatpush1.msra.mxu0 0.0
    %459 = vmatprep.subr.mxu0 0.0
    %460 = vmatpush1.msra.mxu0 0.0
    %461 = vmatprep.subr.mxu0 0.0
    %462 = vmatpush1.msra.mxu0 0.0
    %463 = vmatprep.subr.mxu0 0.0
    %464 = vmatpush1.msra.mxu0 0.0
    %465 = vmatprep.subr.mxu0 0.0
    %466 = vmatpush1.msra.mxu0 0.0
    %467 = vmatprep.subr.mxu0 0.0
    %468 = vmatpush1.msra.mxu0 0.0
    %469 = vmatprep.subr.mxu0 0.0
    %470 = vmatpush1.msra.mxu0 0.0
    %471 = vmatprep.subr.mxu0 0.0
    %472 = vmatpush1.msra.mxu0 0.0
    %473 = vmatprep.subr.mxu0 0.0
    %474 = vmatpush1.msra.mxu0 0.0
    %475 = vmatprep.subr.mxu0 0.0
    %476 = vmatpush1.msra.mxu0 0.0
    %477 = vmatprep.subr.mxu0 0.0
    %478 = vmatpush1.msra.mxu0 0.0
    %479 = vmatprep.subr.mxu0 0.0
    %480 = vmatpush1.msra.mxu0 0.0
    %481 = vmatprep.subr.mxu0 0.0
    %482 = vmatpush1.msra.mxu0 0.0
    %483 = vmatprep.subr.mxu0 0.0
    %484 = vmatpush1.msra.mxu0 0.0
    %485 = vmatprep.subr.mxu0 0.0
    %486 = vmatpush1.msra.mxu0 0.0
    %487 = vmatprep.subr.mxu0 0.0
    %488 = vmatpush1.msra.mxu0 0.0
    %489 = vmatprep.mubr.f32.mxu0 0.0
    %490 = vmatmul.mubr.f32.gmra.mrb[0].mxu0 %v408
    %v491 = vpop.f32.mrb[0].mxu0
    %v492 = vadd.f32 0.0, %v491
    %v493 = vpop.f32.mrb[0].mxu0
    %494 = vdwg.mxu0
    %v495 = vlaneseq
    %v496 = vand.u32 %v495, 127
    %vm497 = vcmp.lt.s32.totalorder %v496, 32
    %v498 = vsel %vm497, %v492, -1e+30
    %499 = vmax.xlane.f32.xlu0 %v498
    %v500 = vpop.xlane.xlu0 %499
    %v501 = vsub.f32 %v498, %v500
    %v502 = vmul.f32 %v501, 1.442695
    %v503 = vpow.pop %v502
    %504 = vadd.xlane.f32.xlu0 %v503
    %v505 = vpop.xlane.xlu0 %504
    %v506 = vlog2.pop %v505
    %v507 = vmul.f32 %v506, 0.6931472
    %v508 = vsub.f32 %v501, %v507
    %509 = vst [vmem:[#allocation11] sm:$0xff] %v508
    %510 = vst [vmem:[#allocation12] sm:$0xff] %v408
    %511 = vst [vmem:[#allocation14] sm:$0xff] %v406
    // Predicated region
    $region46: #{tpu_custom_call.1} parent=1 // pred_check
      _
    $region47: #{tpu_custom_call.1} parent=1 // pred_check_branch
      %513 = sbr.rel (0) target = $region49
    $region48: #{tpu_custom_call.1} parent=1 // pred_region
      %s515 = ssub.s32 128, 128
      %516 = vsyncadd [#allocation4], %s515
      %s518 = sshll.u32 [#allocation11], 4
      %s519 = int_to_ptr.vmem [resolvable:$true] %s518
      %521 = dma.vmem_to_hbm [thread:$0]  %s519, 128, %s6, [#allocation4]
    $region49: #{tpu_custom_call.1} parent=1 // pred_fallthru
      _
    // Predicated region
    $region50: #{tpu_custom_call.1} parent=1 // pred_check
      _
    $region51: #{tpu_custom_call.1} parent=1 // pred_check_branch
      %523 = sbr.rel (0) target = $region53
    $region52: #{tpu_custom_call.1} parent=1 // pred_region
      %s525 = ssub.s32 128, 128
      %526 = vsyncadd [#allocation13], %s525
      %s528 = sshll.u32 [#allocation12], 4
      %s529 = int_to_ptr.vmem [resolvable:$true] %s528
      %531 = dma.vmem_to_hbm [thread:$0]  %s529, 128, %s7, [#allocation13]
    $region53: #{tpu_custom_call.1} parent=1 // pred_fallthru
      _
    // Predicated region
    $region54: #{tpu_custom_call.1} parent=1 // pred_check
      _
    $region55: #{tpu_custom_call.1} parent=1 // pred_check_branch
      %533 = sbr.rel (0) target = $region57
    $region56: #{tpu_custom_call.1} parent=1 // pred_region
      %s535 = ssub.s32 128, 128
      %536 = vsyncadd [#allocation13], %s535
      %s538 = sshll.u32 [#allocation14], 4
      %s539 = int_to_ptr.vmem [resolvable:$true] %s538
      %541 = dma.vmem_to_hbm [thread:$0]  %s539, 128, %s8, [#allocation13]
    $region57: #{tpu_custom_call.1} parent=1 // pred_fallthru
      _
    // Predicated region
    $region58: #{tpu_custom_call.1} parent=1 // pred_check
      _
    $region59: #{tpu_custom_call.1} parent=1 // pred_check_branch
      %543 = sbr.rel (0) target = $region61
    $region60: #{tpu_custom_call.1} parent=1 // pred_region
      %544 = dma.done [#allocation4], 128
    $region61: #{tpu_custom_call.1} parent=1 // pred_fallthru
      _
    // Predicated region
    $region62: #{tpu_custom_call.1} parent=1 // pred_check
      _
    $region63: #{tpu_custom_call.1} parent=1 // pred_check_branch
      %546 = sbr.rel (0) target = $region65
    $region64: #{tpu_custom_call.1} parent=1 // pred_region
      %547 = dma.done [#allocation13], 128
    $region65: #{tpu_custom_call.1} parent=1 // pred_fallthru
      _
    // Predicated region
    $region66: #{tpu_custom_call.1} parent=1 // pred_check
      _
    $region67: #{tpu_custom_call.1} parent=1 // pred_check_branch
      %549 = sbr.rel (0) target = $region69
    $region68: #{tpu_custom_call.1} parent=1 // pred_region
      %550 = dma.done [#allocation13], 128
    $region69: #{tpu_custom_call.1} parent=1 // pred_fallthru
      _
    %551 = vsyncpa [#allocation3], 1
    %552 = vsyncpa [#allocation6], 1
    %553 = vsyncpa [#allocation9], 1
    %554 = vsyncpa [#allocation4], 1
    %555 = vsyncpa [#allocation13], 1

</llo_original>
